<compile_context>
chip_gen: v7x
topology: tpu7x:2x2x1
jax: 0.10.0
libtpu: 0.0.40
codegen_flags: <defaults>
</compile_context>

<pallas_src>
import math
import functools

import jax
import jax.numpy as jnp
from jax import lax
from jax.experimental import pallas as pl
from jax.experimental.pallas import tpu as pltpu


def _pick_block(n, candidates=(256, 128, 64, 32, 16, 8)):
    for c in candidates:
        if n % c == 0:
            return c
    return n  # non-multiple-of-8 seq len -> use the full extent


# ---------------------------------------------------------------------------
# Kernel A: fused QKV projection + per-head softmax attention.
#   grid = (B, H, NQ)   (q-block axis innermost / "arbitrary")
# ---------------------------------------------------------------------------
def _attention_kernel(x_ref, wqkv_ref, bqkv_ref,          # inputs
                      ctx_ref, attnw_ref,                  # outputs
                      q_scr, k_scr, v_scr,                 # VMEM scratch
                      *, dim_heads, q_block):
    qi = pl.program_id(2)

    @pl.when(qi == 0)
    def _project_qkv():
        # One fused (S,D)@(D,3*Dh) matmul per (batch, head); cached across q blocks.
        x = x_ref[0]                                               # (S, D) bf16
        qkv = jnp.dot(x, wqkv_ref[0],
                      preferred_element_type=jnp.float32)          # (S, 3*Dh) f32
        qkv = qkv + bqkv_ref[0]
        scale = 1.0 / math.sqrt(dim_heads)                         # fold scale into q
        q_scr[...] = (qkv[:, :dim_heads] * scale).astype(q_scr.dtype)
        k_scr[...] = qkv[:, dim_heads:2 * dim_heads].astype(k_scr.dtype)
        v_scr[...] = qkv[:, 2 * dim_heads:].astype(v_scr.dtype)

    row0 = pl.multiple_of(qi * q_block, q_block)
    q_blk = q_scr[pl.ds(row0, q_block), :]                         # (TQ, Dh) bf16

    # scores: contract the head dim of both operands (no explicit transpose)
    s = lax.dot_general(q_blk, k_scr[...],
                        dimension_numbers=(((1,), (1,)), ((), ())),
                        preferred_element_type=jnp.float32)        # (TQ, S) f32
    m = jnp.max(s, axis=-1, keepdims=True)
    e = jnp.exp(s - m)
    l = jnp.sum(e, axis=-1, keepdims=True)
    p = e * pl.reciprocal(l, approx=True)                          # EUP reciprocal

    attnw_ref[0, 0] = p.astype(attnw_ref.dtype)                    # (TQ, S)
    ctx = jnp.dot(p.astype(v_scr.dtype), v_scr[...],
                  preferred_element_type=jnp.float32)              # (TQ, Dh)
    ctx_ref[0, 0] = ctx.astype(ctx_ref.dtype)


# ---------------------------------------------------------------------------
# Kernel B: output projection + LayerNorm1 + FeedForward + LayerNorm2.
#   grid = (B, NS)
# ---------------------------------------------------------------------------
def _out_ffn_kernel(ctx_ref, wo_ref, bo_ref,
                    w1_ref, b1_ref, w2_ref, b2_ref,
                    g1_ref, be1_ref, g2_ref, be2_ref,
                    out_ref):
    eps = 1e-5

    # Output projection: one dense (TS,D)@(D,D) MXU matmul (K = D, lane-dense).
    y = jnp.dot(ctx_ref[0], wo_ref[...],
                preferred_element_type=jnp.float32) + bo_ref[...]   # (TS, D) f32

    # LayerNorm 1 (no residual, matching the reference forward)
    mu = jnp.mean(y, axis=-1, keepdims=True)
    yc = y - mu
    var = jnp.mean(yc * yc, axis=-1, keepdims=True)
    y = yc * lax.rsqrt(var + eps) * g1_ref[...] + be1_ref[...]

    # FeedForward: linear2(relu(linear1(y)))  (dropout p=0 -> identity)
    h1 = jnp.dot(y.astype(w1_ref.dtype), w1_ref[...],
                 preferred_element_type=jnp.float32) + b1_ref[...]
    h1 = jnp.maximum(h1, 0.0)
    y2 = jnp.dot(h1.astype(w2_ref.dtype), w2_ref[...],
                 preferred_element_type=jnp.float32) + b2_ref[...]

    # LayerNorm 2 (no residual)
    mu2 = jnp.mean(y2, axis=-1, keepdims=True)
    yc2 = y2 - mu2
    var2 = jnp.mean(yc2 * yc2, axis=-1, keepdims=True)
    out = yc2 * lax.rsqrt(var2 + eps) * g2_ref[...] + be2_ref[...]

    out_ref[0] = out.astype(out_ref.dtype)


# ---------------------------------------------------------------------------
# Wrapper
# ---------------------------------------------------------------------------
def encoder_layer_forward(x, params, *, num_heads):
    B, S, D = x.shape
    F = params["w1"].shape[1]
    assert D % num_heads == 0
    Dh = D // num_heads

    TQ = _pick_block(S)
    NQ = S // TQ if S % TQ == 0 else 1
    TS = _pick_block(S)
    NS = S // TS if S % TS == 0 else 1

    # ---- pack weights: per-head fused QKV ----
    def _head_cols(w):  # (D, D) -> (H, D, Dh)  (columns grouped per head)
        return w.reshape(D, num_heads, Dh).transpose(1, 0, 2)

    wqkv = jnp.concatenate(
        [_head_cols(params["wq"]), _head_cols(params["wk"]), _head_cols(params["wv"])],
        axis=-1).astype(jnp.bfloat16)                                    # (H, D, 3*Dh)
    bqkv = jnp.concatenate(
        [params["bq"].reshape(num_heads, 1, Dh),
         params["bk"].reshape(num_heads, 1, Dh),
         params["bv"].reshape(num_heads, 1, Dh)],
        axis=-1).astype(jnp.float32)                                     # (H, 1, 3*Dh)
    wo = params["wo"].astype(jnp.bfloat16)                               # (D, D)
    w1 = params["w1"].astype(jnp.bfloat16)
    w2 = params["w2"].astype(jnp.bfloat16)
    x_bf16 = x.astype(jnp.bfloat16)

    vmem_limit = 64 * 1024 * 1024  # <= physical VMEM on v5e/v6e/v7x

    # ------------------------- Kernel A: attention -------------------------
    attn_cost = pl.CostEstimate(
        flops=int(2 * B * S * D * 3 * D + 4 * B * num_heads * S * S * Dh),
        transcendentals=int(B * num_heads * S * S),
        bytes_accessed=int(B * S * D * 2 + num_heads * D * 3 * Dh * 2
                           + B * num_heads * S * S * 4
                           + B * num_heads * S * Dh * 2),
    )
    ctx, attn_w = pl.pallas_call(
        functools.partial(_attention_kernel, dim_heads=Dh, q_block=TQ),
        grid=(B, num_heads, NQ),
        in_specs=[
            pl.BlockSpec((1, S, D), lambda b, h, qi: (b, 0, 0)),          # x
            pl.BlockSpec((1, D, 3 * Dh), lambda b, h, qi: (h, 0, 0)),     # fused Wqkv
            pl.BlockSpec((1, 1, 3 * Dh), lambda b, h, qi: (h, 0, 0)),     # fused bqkv
        ],
        out_specs=[
            pl.BlockSpec((1, 1, TQ, Dh), lambda b, h, qi: (b, h, qi, 0)),  # context
            pl.BlockSpec((1, 1, TQ, S), lambda b, h, qi: (b, h, qi, 0)),   # attn weights
        ],
        out_shape=(
            jax.ShapeDtypeStruct((B, num_heads, S, Dh), jnp.bfloat16),
            jax.ShapeDtypeStruct((B, num_heads, S, S), jnp.float32),
        ),
        scratch_shapes=[
            pltpu.VMEM((S, Dh), jnp.bfloat16),   # q (pre-scaled)
            pltpu.VMEM((S, Dh), jnp.bfloat16),   # k
            pltpu.VMEM((S, Dh), jnp.bfloat16),   # v
        ],
        compiler_params=pltpu.CompilerParams(
            dimension_semantics=("parallel", "parallel", "arbitrary"),
            vmem_limit_bytes=vmem_limit,
        ),
        cost_estimate=attn_cost,
    )(x_bf16, wqkv, bqkv)

    # Cheap relayout of the tiny bf16 context (B*S*D elements) so the output
    # projection in Kernel B is one dense K=D MXU matmul instead of H small
    # K=Dh matmuls.
    ctx_bsd = ctx.transpose(0, 2, 1, 3).reshape(B, S, D)                 # (B, S, D) bf16

    # -------------------- Kernel B: out-proj + LN + FFN + LN ---------------
    def _const(shape):
        # grid-invariant operand: single-buffer it (no useless double buffering)
        return pl.BlockSpec(shape, lambda b, si: tuple(0 for _ in shape),
                            pipeline_mode=pl.Buffered(1))

    ffn_cost = pl.CostEstimate(
        flops=int(2 * B * S * D * D + 4 * B * S * D * F),
        transcendentals=int(2 * B * S),
        bytes_accessed=int(B * S * D * 2 + D * D * 2 + 2 * D * F * 2 + B * S * D * 4),
    )
    out = pl.pallas_call(
        _out_ffn_kernel,
        grid=(B, NS),
        in_specs=[
            pl.BlockSpec((1, TS, D), lambda b, si: (b, si, 0)),   # ctx (B,S,D)
            _const((D, D)),               # wo
            _const((1, D)),               # bo
            _const((D, F)),               # w1
            _const((1, F)),               # b1
            _const((F, D)),               # w2
            _const((1, D)),               # b2
            _const((1, D)), _const((1, D)),   # ln1 gamma / beta
            _const((1, D)), _const((1, D)),   # ln2 gamma / beta
        ],
        out_specs=pl.BlockSpec((1, TS, D), lambda b, si: (b, si, 0)),
        out_shape=jax.ShapeDtypeStruct((B, S, D), jnp.float32),
        compiler_params=pltpu.CompilerParams(
            dimension_semantics=("parallel", "parallel"),
            vmem_limit_bytes=vmem_limit,
        ),
        cost_estimate=ffn_cost,
    )(ctx_bsd, wo, params["bo"],
      w1, params["b1"], w2, params["b2"],
      params["g1"], params["be1"], params["g2"], params["be2"])

    return out, attn_w


# ---------------------------------------------------------------------------
# Parameters + pure-JAX fp32 reference (for a loose correctness check)
# ---------------------------------------------------------------------------
def init_params(key, d_model, d_ff):
    ks = jax.random.split(key, 12)
    scale = 0.02

    def lin(kw, kb, d_in, d_out):
        # stored already transposed to (in, out) so the forward does x @ W + b
        w = scale * jax.random.normal(kw, (d_in, d_out), jnp.float32)
        b = scale * jax.random.normal(kb, (1, d_out), jnp.float32)
        return w, b

    wq, bq = lin(ks[0], ks[1], d_model, d_model)
    wk, bk = lin(ks[2], ks[3], d_model, d_model)
    wv, bv = lin(ks[4], ks[5], d_model, d_model)
    wo, bo = lin(ks[6], ks[7], d_model, d_model)
    w1, b1 = lin(ks[8], ks[9], d_model, d_ff)
    w2, b2 = lin(ks[10], ks[11], d_ff, d_model)
    return dict(
        wq=wq, bq=bq, wk=wk, bk=bk, wv=wv, bv=bv, wo=wo, bo=bo,
        w1=w1, b1=b1, w2=w2, b2=b2,
        g1=jnp.ones((1, d_model), jnp.float32), be1=jnp.zeros((1, d_model), jnp.float32),
        g2=jnp.ones((1, d_model), jnp.float32), be2=jnp.zeros((1, d_model), jnp.float32),
    )


def _layer_norm(x, g, b, eps=1e-5):
    mu = jnp.mean(x, axis=-1, keepdims=True)
    var = jnp.mean((x - mu) ** 2, axis=-1, keepdims=True)
    return (x - mu) / jnp.sqrt(var + eps) * g + b


def encoder_layer_reference(x, params, *, num_heads):
    B, S, D = x.shape
    Dh = D // num_heads
    q = x @ params["wq"] + params["bq"]
    k = x @ params["wk"] + params["bk"]
    v = x @ params["wv"] + params["bv"]

    def split(t):
        return t.reshape(B, S, num_heads, Dh).transpose(0, 2, 1, 3)

    qh, kh, vh = split(q), split(k), split(v)
    s = jnp.einsum("bhqd,bhkd->bhqk", qh, kh) / math.sqrt(Dh)
    p = jax.nn.softmax(s, axis=-1)
    ctx = jnp.einsum("bhqk,bhkd->bhqd", p, vh)
    ctx = ctx.transpose(0, 2, 1, 3).reshape(B, S, D)
    y = ctx @ params["wo"] + params["bo"]
    y = _layer_norm(y, params["g1"], params["be1"])
    h1 = jax.nn.relu(y @ params["w1"] + params["b1"])
    y2 = h1 @ params["w2"] + params["b2"]
    y2 = _layer_norm(y2, params["g2"], params["be2"])
    return y2, p


if __name__ == "__main__":
    # small shapes consistent with the module
    B, S, d_model, num_heads, d_ff = 2, 8, 32, 4, 64

    key = jax.random.PRNGKey(0)
    kx, kp = jax.random.split(key)
    x = jax.random.normal(kx, (B, S, d_model), jnp.float32)
    params = init_params(kp, d_model, d_ff)

    out, attn_w = encoder_layer_forward(x, params, num_heads=num_heads)
    jax.block_until_ready((out, attn_w))

    assert out.shape == (B, S, d_model)
    assert attn_w.shape == (B, num_heads, S, S)

    # softmax rows sum to ~1 (approx-reciprocal tolerance)
    assert bool(jnp.allclose(jnp.sum(attn_w, axis=-1), 1.0, atol=5e-3))

    # loose check against a pure-JAX fp32 reference (kernel uses bf16 MXU inputs)
    ref_out, ref_attn = encoder_layer_reference(x, params, num_heads=num_heads)
    assert bool(jnp.max(jnp.abs(attn_w - ref_attn)) < 2e-2)
    assert bool(jnp.max(jnp.abs(out - ref_out)) < 1e-1)

    print("KERNEL_OK")
</pallas_src>

<mosaic_0001>
module attributes {stable_mosaic.version = 11 : i64} {
  func.func @_attention_kernel(%arg0: i32, %arg1: i32, %arg2: i32, %arg3: memref<1x8x32xbf16, #tpu.memory_space<vmem>>, %arg4: memref<1x32x24xbf16, #tpu.memory_space<vmem>>, %arg5: memref<1x1x24xf32, #tpu.memory_space<vmem>>, %arg6: memref<1x1x8x8xbf16, #tpu.memory_space<vmem>>, %arg7: memref<1x1x8x8xf32, #tpu.memory_space<vmem>>, %arg8: memref<8x8xbf16, #tpu.memory_space<vmem>>, %arg9: memref<8x8xbf16, #tpu.memory_space<vmem>>, %arg10: memref<8x8xbf16, #tpu.memory_space<vmem>>) attributes {dimension_semantics = [#tpu.dimension_semantics<parallel>, #tpu.dimension_semantics<parallel>, #tpu.dimension_semantics<arbitrary>], iteration_bounds = array<i64: 2, 4, 1>, scalar_prefetch = 0 : i64, scratch_operands = 3 : i64, tpu.core_type = #tpu.core_type<tc>, window_params = [{transform_indices = @transform_0, window_bounds = array<i64: 1, 8, 32>}, {transform_indices = @transform_1, window_bounds = array<i64: 1, 32, 24>}, {transform_indices = @transform_2, window_bounds = array<i64: 1, 1, 24>}, {transform_indices = @transform_3, window_bounds = array<i64: 1, 1, 8, 8>}, {transform_indices = @transform_4, window_bounds = array<i64: 1, 1, 8, 8>}]} {
    %c0_i32 = arith.constant 0 : i32
    %0 = arith.cmpi eq, %arg2, %c0_i32 : i32
    %1 = arith.extui %0 : i1 to i32
    %c0_i32_0 = arith.constant 0 : i32
    %2 = arith.cmpi ne, %1, %c0_i32_0 : i32
    scf.if %2 {
      %c0_16 = arith.constant 0 : index
      %c0_17 = arith.constant 0 : index
      %c0_18 = arith.constant 0 : index
      %29 = vector.load %arg3[%c0_16, %c0_17, %c0_18] : memref<1x8x32xbf16, #tpu.memory_space<vmem>>, vector<1x8x32xbf16>
      %30 = vector.shape_cast %29 : vector<1x8x32xbf16> to vector<8x32xbf16>
      %c0_19 = arith.constant 0 : index
      %c0_20 = arith.constant 0 : index
      %c0_21 = arith.constant 0 : index
      %31 = vector.load %arg4[%c0_19, %c0_20, %c0_21] : memref<1x32x24xbf16, #tpu.memory_space<vmem>>, vector<1x32x24xbf16>
      %32 = vector.shape_cast %31 : vector<1x32x24xbf16> to vector<32x24xbf16>
      %cst_22 = arith.constant dense<0.000000e+00> : vector<8x24xf32>
      %33 = tpu.matmul %30, %32, %cst_22 {dimension_numbers = #tpu.dot_dimension_numbers<[1], [0], [0], [1], [0, 0, 1, 1], [], []>} : vector<8x32xbf16>, vector<32x24xbf16>, vector<8x24xf32> -> vector<8x24xf32>
      %c0_23 = arith.constant 0 : index
      %c0_24 = arith.constant 0 : index
      %c0_25 = arith.constant 0 : index
      %34 = vector.load %arg5[%c0_23, %c0_24, %c0_25] : memref<1x1x24xf32, #tpu.memory_space<vmem>>, vector<1x1x24xf32>
      %35 = vector.shape_cast %34 : vector<1x1x24xf32> to vector<1x24xf32>
      %36 = vector.broadcast %35 : vector<1x24xf32> to vector<8x24xf32>
      %37 = arith.addf %33, %36 : vector<8x24xf32>
      %38 = vector.extract_strided_slice %37 {offsets = [0, 0], sizes = [8, 8], strides = [1, 1]} : vector<8x24xf32> to vector<8x8xf32>
      %cst_26 = arith.constant 0.353553385 : f32
      %39 = vector.broadcast %cst_26 : f32 to vector<8x8xf32>
      %40 = arith.mulf %38, %39 : vector<8x8xf32>
      %41 = arith.truncf %40 : vector<8x8xf32> to vector<8x8xbf16>
      %c0_27 = arith.constant 0 : index
      %c0_28 = arith.constant 0 : index
      %42 = vector.load %arg8[%c0_27, %c0_28] : memref<8x8xbf16, #tpu.memory_space<vmem>>, vector<8x8xbf16>
      tpu.vector_store %arg8[%c0_27, %c0_28], %41 {strides = array<i32>} : memref<8x8xbf16, #tpu.memory_space<vmem>>, vector<8x8xbf16>,
      %43 = vector.extract_strided_slice %37 {offsets = [0, 8], sizes = [8, 8], strides = [1, 1]} : vector<8x24xf32> to vector<8x8xf32>
      %44 = arith.truncf %43 : vector<8x8xf32> to vector<8x8xbf16>
      %c0_29 = arith.constant 0 : index
      %c0_30 = arith.constant 0 : index
      %45 = vector.load %arg9[%c0_29, %c0_30] : memref<8x8xbf16, #tpu.memory_space<vmem>>, vector<8x8xbf16>
      tpu.vector_store %arg9[%c0_29, %c0_30], %44 {strides = array<i32>} : memref<8x8xbf16, #tpu.memory_space<vmem>>, vector<8x8xbf16>,
      %46 = vector.extract_strided_slice %37 {offsets = [0, 16], sizes = [8, 8], strides = [1, 1]} : vector<8x24xf32> to vector<8x8xf32>
      %47 = arith.truncf %46 : vector<8x8xf32> to vector<8x8xbf16>
      %c0_31 = arith.constant 0 : index
      %c0_32 = arith.constant 0 : index
      %48 = vector.load %arg10[%c0_31, %c0_32] : memref<8x8xbf16, #tpu.memory_space<vmem>>, vector<8x8xbf16>
      tpu.vector_store %arg10[%c0_31, %c0_32], %47 {strides = array<i32>} : memref<8x8xbf16, #tpu.memory_space<vmem>>, vector<8x8xbf16>,
    } else {
    }
    %c8_i32 = arith.constant 8 : i32
    %3 = arith.muli %arg2, %c8_i32 : i32
    %4 = tpu.assume_multiple %3, 8 : i32
    %5 = arith.index_cast %4 : i32 to index
    %c0 = arith.constant 0 : index
    %6 = vector.load %arg8[%5, %c0] : memref<8x8xbf16, #tpu.memory_space<vmem>>, vector<8x8xbf16>
    %c0_1 = arith.constant 0 : index
    %c0_2 = arith.constant 0 : index
    %7 = vector.load %arg9[%c0_1, %c0_2] : memref<8x8xbf16, #tpu.memory_space<vmem>>, vector<8x8xbf16>
    %cst = arith.constant dense<0.000000e+00> : vector<8x8xf32>
    %8 = tpu.matmul %6, %7, %cst {dimension_numbers = #tpu.dot_dimension_numbers<[1], [1], [0], [0], [0, 0, 1, 0], [], []>} : vector<8x8xbf16>, vector<8x8xbf16>, vector<8x8xf32> -> vector<8x8xf32>
    %cst_3 = arith.constant dense<0xFF800000> : vector<8xf32>
    %9 = vector.multi_reduction <maximumf>, %8, %cst_3 [1] : vector<8x8xf32> to vector<8xf32>
    %10 = vector.shape_cast %9 : vector<8xf32> to vector<8x1xf32>
    %11 = vector.broadcast %10 : vector<8x1xf32> to vector<8x8xf32>
    %12 = arith.subf %8, %11 : vector<8x8xf32>
    %13 = math.exp %12 : vector<8x8xf32>
    %cst_4 = arith.constant dense<0.000000e+00> : vector<8xf32>
    %14 = vector.multi_reduction <add>, %13, %cst_4 [1] : vector<8x8xf32> to vector<8xf32>
    %15 = vector.shape_cast %14 : vector<8xf32> to vector<8x1xf32>
    %16 = tpu.reciprocal %15 {approx = true} : vector<8x1xf32> -> vector<8x1xf32>
    %17 = vector.broadcast %16 : vector<8x1xf32> to vector<8x8xf32>
    %18 = arith.mulf %13, %17 : vector<8x8xf32>
    %c0_5 = arith.constant 0 : index
    %c0_6 = arith.constant 0 : index
    %c0_7 = arith.constant 0 : index
    %c0_8 = arith.constant 0 : index
    %19 = vector.load %arg7[%c0_5, %c0_6, %c0_7, %c0_8] : memref<1x1x8x8xf32, #tpu.memory_space<vmem>>, vector<1x1x8x8xf32>
    %20 = vector.shape_cast %19 : vector<1x1x8x8xf32> to vector<8x8xf32>
    %21 = vector.shape_cast %18 : vector<8x8xf32> to vector<1x1x8x8xf32>
    tpu.vector_store %arg7[%c0_5, %c0_6, %c0_7, %c0_8], %21 {strides = array<i32>} : memref<1x1x8x8xf32, #tpu.memory_space<vmem>>, vector<1x1x8x8xf32>,
    %22 = arith.truncf %18 : vector<8x8xf32> to vector<8x8xbf16>
    %c0_9 = arith.constant 0 : index
    %c0_10 = arith.constant 0 : index
    %23 = vector.load %arg10[%c0_9, %c0_10] : memref<8x8xbf16, #tpu.memory_space<vmem>>, vector<8x8xbf16>
    %cst_11 = arith.constant dense<0.000000e+00> : vector<8x8xf32>
    %24 = tpu.matmul %22, %23, %cst_11 {dimension_numbers = #tpu.dot_dimension_numbers<[1], [0], [0], [1], [0, 0, 1, 1], [], []>} : vector<8x8xbf16>, vector<8x8xbf16>, vector<8x8xf32> -> vector<8x8xf32>
    %25 = arith.truncf %24 : vector<8x8xf32> to vector<8x8xbf16>
    %c0_12 = arith.constant 0 : index
    %c0_13 = arith.constant 0 : index
    %c0_14 = arith.constant 0 : index
    %c0_15 = arith.constant 0 : index
    %26 = vector.load %arg6[%c0_12, %c0_13, %c0_14, %c0_15] : memref<1x1x8x8xbf16, #tpu.memory_space<vmem>>, vector<1x1x8x8xbf16>
    %27 = vector.shape_cast %26 : vector<1x1x8x8xbf16> to vector<8x8xbf16>
    %28 = vector.shape_cast %25 : vector<8x8xbf16> to vector<1x1x8x8xbf16>
    tpu.vector_store %arg6[%c0_12, %c0_13, %c0_14, %c0_15], %28 {strides = array<i32>} : memref<1x1x8x8xbf16, #tpu.memory_space<vmem>>, vector<1x1x8x8xbf16>,
    return
  }
  func.func @transform_0(%arg0: i32, %arg1: i32, %arg2: i32) -> (i32, i32, i32) {
    %c0_i32 = arith.constant 0 : i32
    %c0_i32_0 = arith.constant 0 : i32
    %c0_i32_1 = arith.constant 0 : i32
    return %arg0, %c0_i32, %c0_i32_0 : i32, i32, i32
  }
  func.func @transform_1(%arg0: i32, %arg1: i32, %arg2: i32) -> (i32, i32, i32) {
    %c0_i32 = arith.constant 0 : i32
    %c0_i32_0 = arith.constant 0 : i32
    %c0_i32_1 = arith.constant 0 : i32
    return %arg1, %c0_i32, %c0_i32_0 : i32, i32, i32
  }
  func.func @transform_2(%arg0: i32, %arg1: i32, %arg2: i32) -> (i32, i32, i32) {
    %c0_i32 = arith.constant 0 : i32
    %c0_i32_0 = arith.constant 0 : i32
    %c0_i32_1 = arith.constant 0 : i32
    return %arg1, %c0_i32, %c0_i32_0 : i32, i32, i32
  }
  func.func @transform_3(%arg0: i32, %arg1: i32, %arg2: i32) -> (i32, i32, i32, i32) {
    %c0_i32 = arith.constant 0 : i32
    %c0_i32_0 = arith.constant 0 : i32
    return %arg0, %arg1, %arg2, %c0_i32 : i32, i32, i32, i32
  }
  func.func @transform_4(%arg0: i32, %arg1: i32, %arg2: i32) -> (i32, i32, i32, i32) {
    %c0_i32 = arith.constant 0 : i32
    %c0_i32_0 = arith.constant 0 : i32
    return %arg0, %arg1, %arg2, %c0_i32 : i32, i32, i32, i32
  }
}

</mosaic_0001>

<llo_original>
// kernel: tpu_custom_call.1
$region0: #{tpu_custom_call.1}
  #allocation0 [shape = 'u32[]', space=smem, size = 0x4, offset = 0x4, fixed_abs, tag = 'smem constant byte address 0x4 - core index']
  #allocation1 [shape = 'u32[144,128]{1,0:T(1,128)}', space=vmem, size = 0x12000, scoped, tag = 'internal scratch']
  #allocation2 [shape = 'bf16[8,8]{1,0:T(8,128)(2,1)}', space=vmem, size = 0x800, scoped, tag = 'scratch operand']
  #allocation3 [shape = 'bf16[8,8]{1,0:T(8,128)(2,1)}', space=vmem, size = 0x800, scoped, tag = 'scratch operand']
  #allocation4 [shape = 'bf16[8,8]{1,0:T(8,128)(2,1)}', space=vmem, size = 0x800, scoped, tag = 'scratch operand']
  %s0 = inlined_call_operand.hbm [shape: bf16[2,8,32], index: 0, kind: input, shape index: {}]
  %s1 = inlined_call_operand.hbm [shape: bf16[4,32,24], index: 1, kind: input, shape index: {}]
  %s2 = inlined_call_operand.hbm [shape: f32[4,1,24], index: 2, kind: input, shape index: {}]
  %s3 = inlined_call_operand.hbm [shape: bf16[2,4,8,8], index: 3, kind: output, shape index: {0}]
  %s4 = inlined_call_operand.hbm [shape: f32[2,4,8,8], index: 4, kind: output, shape index: {1}]
  %5 = xla_tuple %s3, %s4
  %s6 = sld [smem:[#allocation0]]
  $region69: #{tpu_custom_call.1} parent=0
    _
  %s8 = ssub.s32 1, %s6
  %s9 = scalar_select 0, %s8, %s6
  $region1: #{tpu_custom_call.1} parent=0
    #allocation5 [shape = 'u8[4096]{0}', space=vmem, size = 0x1000, scoped, tag = 'input window, operand 0']
    #allocation6 [shape = 's32[2]{0}', space=sflag, size = 0x8, scoped, tag = 'scoped memory for tpu_custom_call.1']
    #allocation7 [shape = 's32[2]{0}', space=sflag, size = 0x8, scoped, tag = 'scoped memory for tpu_custom_call.1']
    #allocation8 [shape = 'u8[16384]{0}', space=vmem, size = 0x4000, scoped, tag = 'input window, operand 1']
    #allocation9 [shape = 's32[2]{0}', space=sflag, size = 0x8, scoped, tag = 'scoped memory for tpu_custom_call.1']
    #allocation10 [shape = 'u8[1024]{0}', space=vmem, size = 0x400, scoped, tag = 'input window, operand 2']
    #allocation11 [shape = 'u8[4096]{0}', space=vmem, size = 0x1000, scoped, tag = 'output window, operand 0']
    #allocation12 [shape = 'u8[8192]{0}', space=vmem, size = 0x2000, scoped, tag = 'output window, operand 1']
    #allocation13 [shape = 's32[2]{0}', space=sflag, size = 0x8, scoped, tag = 'scoped memory for tpu_custom_call.1']
    %10 = vsyncpa [#allocation6], 0
    %s11 = scalar_lea.sflag [#allocation6], 1
    %12 = vsyncpa %s11, 0
    %13 = vsyncpa [#allocation9], 0
    %s14 = scalar_lea.sflag [#allocation9], 1
    %15 = vsyncpa %s14, 0
    %16 = vsyncpa [#allocation7], 0
    %s17 = scalar_lea.sflag [#allocation7], 1
    %18 = vsyncpa %s17, 0
    %19 = vsyncpa [#allocation13], 0
    %s20 = scalar_lea.sflag [#allocation13], 1
    %21 = vsyncpa %s20, 0
    loop: start=0, step=1, limit=10
    $region2: #{tpu_custom_call.1} parent=1 // loop_pre_header
      _
    $region3: #{tpu_custom_call.1} parent=1 // loop_header
      %s23 = sphi 0, %s27
      %p24 = scmp.ge.s32.totalorder %s23, 10
      %s30 = sphi 0, %s49
      %s31 = sphi 0, %s45
      %s32 = sphi 0, %s41
      %s33 = sphi 0, %s30
      %s34 = sphi 0, %s31
      %s35 = sphi 0, %s32
      %s36 = sphi 0, %s33
      %s37 = sphi 0, %s34
      %s38 = sphi 0, %s35
      %s52 = sphi 0, %s54
      %s55 = sphi 0, %s52
      %s56 = sphi 0, %s55
      %s72 = sphi 0, %s56
      %s78 = sphi 0, %s80
      %s81 = sphi 0, %s78
      %s82 = sphi 0, %s81
      %s98 = sphi 0, %s82
      %s104 = sphi 0, %s106
      %s107 = sphi 0, %s104
      %s108 = sphi 0, %s107
      %s124 = sphi 0, %s108
      %s134 = sphi 0, %s136
      %s137 = sphi 0, %s134
      %s138 = sphi 0, %s137
      %s154 = sphi 0, %s138
      %s164 = sphi 0, %s166
      %s167 = sphi 0, %s164
      %s168 = sphi 0, %s167
      %s184 = sphi 0, %s168
    $region4: #{tpu_custom_call.1} parent=1 // loop_header_branch
      %26 = sbr.rel (%p24) target = $region8
    $region5: #{tpu_custom_call.1} parent=1 // loop_body
      %s28 = ssub.s32 %s23, 1
      %s29 = ssub.s32 %s23, 2
      %s39 = sadd.s32 1, %s32
      %p40 = scmp.ge.s32.totalorder %s39, 1
      %s41 = scalar_select %p40, 0, %s39
      %s42 = sadd.s32 1, %s31
      %s43 = scalar_select %p40, %s42, %s31
      %p44 = scmp.ge.s32.totalorder %s43, 4
      %s45 = scalar_select %p44, 0, %s43
      %s46 = sadd.s32 1, %s30
      %s47 = scalar_select %p44, %s46, %s30
      %p48 = scmp.ge.s32.totalorder %s47, 2
      %s49 = scalar_select %p48, 0, %s47
      %s50 = ssub.s32 %s30, %s49
      %p51 = scmp.eq.s32.totalorder %s50, 0
      %s53 = sadd.s32 %s52, 1
      %s54 = scalar_select %p51, %s52, %s53
      %p57 = pneg %p51
      %p58 = scmp.eq.s32.totalorder %s23, 7
      %p59 = por %p57, %p58
      %p60 = scmp.ne.s32.totalorder %s52, %s55
      %p61 = scmp.eq.s32.totalorder %s23, 0
      %p62 = por %p60, %p61
      %p63 = scmp.ne.s32.totalorder %s52, %s55
      %p64 = scmp.eq.s32.totalorder %s28, 7
      %p65 = por %p63, %p64
      %p66 = scmp.ne.s32.totalorder %s55, %s56
      %p67 = scmp.eq.s32.totalorder %s28, 0
      %p68 = por %p66, %p67
      %p69 = scmp.ne.s32.totalorder %s55, %s56
      %p70 = scmp.eq.s32.totalorder %s29, 7
      %p71 = por %p69, %p70
      %p73 = scmp.ne.s32.totalorder %s56, %s72
      %p74 = scmp.eq.s32.totalorder %s29, 0
      %p75 = por %p73, %p74
      %s76 = ssub.s32 %s31, %s45
      %p77 = scmp.eq.s32.totalorder %s76, 0
      %s79 = sadd.s32 %s78, 1
      %s80 = scalar_select %p77, %s78, %s79
      %p83 = pneg %p77
      %p84 = scmp.eq.s32.totalorder %s23, 7
      %p85 = por %p83, %p84
      %p86 = scmp.ne.s32.totalorder %s78, %s81
      %p87 = scmp.eq.s32.totalorder %s23, 0
      %p88 = por %p86, %p87
      %p89 = scmp.ne.s32.totalorder %s78, %s81
      %p90 = scmp.eq.s32.totalorder %s28, 7
      %p91 = por %p89, %p90
      %p92 = scmp.ne.s32.totalorder %s81, %s82
      %p93 = scmp.eq.s32.totalorder %s28, 0
      %p94 = por %p92, %p93
      %p95 = scmp.ne.s32.totalorder %s81, %s82
      %p96 = scmp.eq.s32.totalorder %s29, 7
      %p97 = por %p95, %p96
      %p99 = scmp.ne.s32.totalorder %s82, %s98
      %p100 = scmp.eq.s32.totalorder %s29, 0
      %p101 = por %p99, %p100
      %s102 = ssub.s32 %s31, %s45
      %p103 = scmp.eq.s32.totalorder %s102, 0
      %s105 = sadd.s32 %s104, 1
      %s106 = scalar_select %p103, %s104, %s105
      %p109 = pneg %p103
      %p110 = scmp.eq.s32.totalorder %s23, 7
      %p111 = por %p109, %p110
      %p112 = scmp.ne.s32.totalorder %s104, %s107
      %p113 = scmp.eq.s32.totalorder %s23, 0
      %p114 = por %p112, %p113
      %p115 = scmp.ne.s32.totalorder %s104, %s107
      %p116 = scmp.eq.s32.totalorder %s28, 7
      %p117 = por %p115, %p116
      %p118 = scmp.ne.s32.totalorder %s107, %s108
      %p119 = scmp.eq.s32.totalorder %s28, 0
      %p120 = por %p118, %p119
      %p121 = scmp.ne.s32.totalorder %s107, %s108
      %p122 = scmp.eq.s32.totalorder %s29, 7
      %p123 = por %p121, %p122
      %p125 = scmp.ne.s32.totalorder %s108, %s124
      %p126 = scmp.eq.s32.totalorder %s29, 0
      %p127 = por %p125, %p126
      %s128 = ssub.s32 %s30, %s49
      %s129 = ssub.s32 %s31, %s45
      %s130 = sor.u32 %s128, %s129
      %s131 = ssub.s32 %s32, %s41
      %s132 = sor.u32 %s130, %s131
      %p133 = scmp.eq.s32.totalorder %s132, 0
      %s135 = sadd.s32 %s134, 1
      %s136 = scalar_select %p133, %s134, %s135
      %p139 = pneg %p133
      %p140 = scmp.eq.s32.totalorder %s23, 7
      %p141 = por %p139, %p140
      %p142 = scmp.ne.s32.totalorder %s134, %s137
      %p143 = scmp.eq.s32.totalorder %s23, 0
      %p144 = por %p142, %p143
      %p145 = scmp.ne.s32.totalorder %s134, %s137
      %p146 = scmp.eq.s32.totalorder %s28, 7
      %p147 = por %p145, %p146
      %p148 = scmp.ne.s32.totalorder %s137, %s138
      %p149 = scmp.eq.s32.totalorder %s28, 0
      %p150 = por %p148, %p149
      %p151 = scmp.ne.s32.totalorder %s137, %s138
      %p152 = scmp.eq.s32.totalorder %s29, 7
      %p153 = por %p151, %p152
      %p155 = scmp.ne.s32.totalorder %s138, %s154
      %p156 = scmp.eq.s32.totalorder %s29, 0
      %p157 = por %p155, %p156
      %s158 = ssub.s32 %s30, %s49
      %s159 = ssub.s32 %s31, %s45
      %s160 = sor.u32 %s158, %s159
      %s161 = ssub.s32 %s32, %s41
      %s162 = sor.u32 %s160, %s161
      %p163 = scmp.eq.s32.totalorder %s162, 0
      %s165 = sadd.s32 %s164, 1
      %s166 = scalar_select %p163, %s164, %s165
      %p169 = pneg %p163
      %p170 = scmp.eq.s32.totalorder %s23, 7
      %p171 = por %p169, %p170
      %p172 = scmp.ne.s32.totalorder %s164, %s167
      %p173 = scmp.eq.s32.totalorder %s23, 0
      %p174 = por %p172, %p173
      %p175 = scmp.ne.s32.totalorder %s164, %s167
      %p176 = scmp.eq.s32.totalorder %s28, 7
      %p177 = por %p175, %p176
      %p178 = scmp.ne.s32.totalorder %s167, %s168
      %p179 = scmp.eq.s32.totalorder %s28, 0
      %p180 = por %p178, %p179
      %p181 = scmp.ne.s32.totalorder %s167, %s168
      %p182 = scmp.eq.s32.totalorder %s29, 7
      %p183 = por %p181, %p182
      %p185 = scmp.ne.s32.totalorder %s168, %s184
      %p186 = scmp.eq.s32.totalorder %s29, 0
      %p187 = por %p185, %p186
      %p188 = scmp.le.s32.totalorder 1, %s23
      %p189 = scmp.lt.s32.totalorder %s23, 9
      %p190 = pnand %p188, %p189
      %p191 = pneg %p190
      // Predicated region
      $region9: #{tpu_custom_call.1} parent=5 // pred_check
        _
      $region10: #{tpu_custom_call.1} parent=5 // pred_check_branch
        %193 = sbr.rel (%p190) target = $region12
      $region11: #{tpu_custom_call.1} parent=5 // pred_region
        %s194 = ssub.s32 %s23, 1
      $region12: #{tpu_custom_call.1} parent=5 // pred_fallthru
        _
      %p195 = scmp.lt.s32.totalorder %s23, 8
      // Predicated region
      $region13: #{tpu_custom_call.1} parent=5 // pred_check
        %p196 = pneg %p195
      $region14: #{tpu_custom_call.1} parent=5 // pred_check_branch
        %198 = sbr.rel (%p196) target = $region16
      $region15: #{tpu_custom_call.1} parent=5 // pred_region
        // Predicated region
        $region17: #{tpu_custom_call.1} parent=15 // pred_check
          %p199 = pneg %p62
        $region18: #{tpu_custom_call.1} parent=15 // pred_check_branch
          %201 = sbr.rel (%p199) target = $region20
        $region19: #{tpu_custom_call.1} parent=15 // pred_region
          %s202 = sand.u32 %s52, 1
          %s203 = scalar_lea.sflag [#allocation6], %s202
          %s204 = sand.u32 %s52, 1
          %s205 = smul.addr %s204, 4
          %s206 = scalar_lea.vmem [#allocation5], %s205
          %s208 = ssub.s32 64, 64
          %209 = vsyncadd %s203, %s208
          %s210 = smul.addr %s30, 64
          %s211 = scalar_lea.hbm %s0, %s210
          %s213 = sshll.u32 %s206, 4
          %s214 = int_to_ptr.vmem [resolvable:$true] %s213
          %216 = dma.hbm_to_vmem [thread:$0]  %s211, 64, %s214, %s203
        $region20: #{tpu_custom_call.1} parent=15 // pred_fallthru
          _
        // Predicated region
        $region21: #{tpu_custom_call.1} parent=15 // pred_check
          %p217 = pneg %p88
        $region22: #{tpu_custom_call.1} parent=15 // pred_check_branch
          %219 = sbr.rel (%p217) target = $region24
        $region23: #{tpu_custom_call.1} parent=15 // pred_region
          %s220 = sand.u32 %s23, 1
          %s221 = scalar_lea.sflag [#allocation9], %s220
          %s222 = sand.u32 %s78, 1
          %s223 = smul.addr %s222, 16
          %s224 = scalar_lea.vmem [#allocation8], %s223
          %s226 = ssub.s32 256, 256
          %227 = vsyncadd %s221, %s226
          %s228 = smul.addr %s31, 4
          %s229 = smul.addr %s228, 64
          %s230 = scalar_lea.hbm %s1, %s229
          %s231 = sshll.u32 %s224, 4
          %s232 = int_to_ptr.vmem [resolvable:$true] %s231
          %237 = dma.hbm_to_vmem [thread:$0]  %s230, 256, %s232, %s221, 64, 64, 4
        $region24: #{tpu_custom_call.1} parent=15 // pred_fallthru
          _
        // Predicated region
        $region25: #{tpu_custom_call.1} parent=15 // pred_check
          %p238 = pneg %p114
        $region26: #{tpu_custom_call.1} parent=15 // pred_check_branch
          %240 = sbr.rel (%p238) target = $region28
        $region27: #{tpu_custom_call.1} parent=15 // pred_region
          %s241 = sand.u32 %s23, 1
          %s242 = scalar_lea.sflag [#allocation9], %s241
          %s243 = sand.u32 %s104, 1
          %s244 = scalar_lea.vmem [#allocation10], %s243
          %s246 = ssub.s32 16, 16
          %247 = vsyncadd %s242, %s246
          %s248 = smul.addr %s31, 16
          %s249 = scalar_lea.hbm %s2, %s248
          %s251 = sshll.u32 %s244, 4
          %s252 = int_to_ptr.vmem [resolvable:$true] %s251
          %254 = dma.hbm_to_vmem [thread:$0]  %s249, 16, %s252, %s242
        $region28: #{tpu_custom_call.1} parent=15 // pred_fallthru
          _
      $region16: #{tpu_custom_call.1} parent=5 // pred_fallthru
        _
      %p255 = scmp.le.s32.totalorder 1, %s23
      %p256 = scmp.lt.s32.totalorder %s23, 9
      %p257 = pnand %p255, %p256
      %p258 = pneg %p257
      // Predicated region
      $region29: #{tpu_custom_call.1} parent=5 // pred_check
        _
      $region30: #{tpu_custom_call.1} parent=5 // pred_check_branch
        %260 = sbr.rel (%p257) target = $region32
      $region31: #{tpu_custom_call.1} parent=5 // pred_region
        %s261 = ssub.s32 %s23, 1
        %s262 = sand.u32 %s55, 1
        %s263 = scalar_lea.sflag [#allocation6], %s262
        %s264 = sand.u32 %s55, 1
        %s265 = smul.addr %s264, 4
        %s266 = scalar_lea.vmem [#allocation5], %s265
        // Predicated region
        $region33: #{tpu_custom_call.1} parent=31 // pred_check
          %p267 = pneg %p68
        $region34: #{tpu_custom_call.1} parent=31 // pred_check_branch
          %269 = sbr.rel (%p267) target = $region36
        $region35: #{tpu_custom_call.1} parent=31 // pred_region
          %270 = dma.done %s263, 64
        $region36: #{tpu_custom_call.1} parent=31 // pred_fallthru
          _
        %s271 = sand.u32 %s28, 1
        %s272 = scalar_lea.sflag [#allocation9], %s271
        %s273 = sand.u32 %s81, 1
        %s274 = smul.addr %s273, 16
        %s275 = scalar_lea.vmem [#allocation8], %s274
        // Predicated region
        $region37: #{tpu_custom_call.1} parent=31 // pred_check
          %p276 = pneg %p94
        $region38: #{tpu_custom_call.1} parent=31 // pred_check_branch
          %278 = sbr.rel (%p276) target = $region40
        $region39: #{tpu_custom_call.1} parent=31 // pred_region
          %279 = dma.done %s272, 256
        $region40: #{tpu_custom_call.1} parent=31 // pred_fallthru
          _
        %s280 = sand.u32 %s28, 1
        %s281 = scalar_lea.sflag [#allocation9], %s280
        %s282 = sand.u32 %s107, 1
        %s283 = scalar_lea.vmem [#allocation10], %s282
        // Predicated region
        $region41: #{tpu_custom_call.1} parent=31 // pred_check
          %p284 = pneg %p120
        $region42: #{tpu_custom_call.1} parent=31 // pred_check_branch
          %286 = sbr.rel (%p284) target = $region44
        $region43: #{tpu_custom_call.1} parent=31 // pred_region
          %287 = dma.done %s281, 16
        $region44: #{tpu_custom_call.1} parent=31 // pred_fallthru
          _
        %s288 = sand.u32 %s55, 1
        %s289 = scalar_lea.sflag [#allocation6], %s288
        %s290 = sand.u32 %s55, 1
        %s291 = smul.addr %s290, 4
        %s292 = scalar_lea.vmem [#allocation5], %s291
        %p293 = pneg %p68
        %p294 = pneg %p65
        %s295 = sand.u32 %s28, 1
        %s296 = scalar_lea.sflag [#allocation9], %s295
        %s297 = sand.u32 %s81, 1
        %s298 = smul.addr %s297, 16
        %s299 = scalar_lea.vmem [#allocation8], %s298
        %p300 = pneg %p94
        %p301 = pneg %p91
        %s302 = sand.u32 %s28, 1
        %s303 = scalar_lea.sflag [#allocation9], %s302
        %s304 = sand.u32 %s107, 1
        %s305 = scalar_lea.vmem [#allocation10], %s304
        %p306 = pneg %p120
        %p307 = pneg %p117
        %p308 = pneg %p150
        %p309 = pneg %p147
        %s310 = sand.u32 %s137, 1
        %s311 = scalar_lea.sflag [#allocation7], %s310
        %s312 = sand.u32 %s137, 1
        %s313 = smul.addr %s312, 4
        %s314 = scalar_lea.vmem [#allocation11], %s313
        %p315 = pneg %p180
        %p316 = pneg %p177
        %s317 = sand.u32 %s167, 1
        %s318 = scalar_lea.sflag [#allocation13], %s317
        %s319 = sand.u32 %s167, 1
        %s320 = smul.addr %s319, 8
        %s321 = scalar_lea.vmem [#allocation12], %s320
        %p323 = scmp.eq.s32.totalorder %s35, 0
        // Predicated region
        $region45: #{tpu_custom_call.1} parent=31 // pred_check
          %p324 = pneg %p323
        $region46: #{tpu_custom_call.1} parent=31 // pred_check_branch
          %326 = sbr.rel (%p324) target = $region48
        $region47: #{tpu_custom_call.1} parent=31 // pred_region
          %v327 = vld [vmem:[%s266] sm:$0xf]
          %v328 = vld [vmem:[%s275] sm:$0xf]
          %v329 = vld [vmem:[%s275 + $0x4] sm:$0xf]
          %v330 = vld [vmem:[%s275 + $0x8] sm:$0xf]
          %v331 = vld [vmem:[%s275 + $0xc] sm:$0xf]
          %v332 = vld [vmem:[%s283] sm:$0x1]
          %v334 = vlaneseq
          %v335 = vshrl.u32 %v334, 7
          %v336 = vsub.s32 0, %v335
          %v337 = vrot.slane %v332, %v336
          %v343 = vunpack.c.l.b16 %v328
          %v344 = vunpack.c.l.b16 %v329
          %v345 = vunpack.c.l.b16 %v330
          %v346 = vunpack.c.l.b16 %v331
          %v347 = vpack.c.b16 %v344, %v343
          %v348 = vpack.c.b16 %v346, %v345
          %vm351 = vcmask 261120
          %v353 = vsel %vm351, %v327, 0
          %355 = vmatprep.subr.bf16.mxu0 0
          %356 = vmatpush1.bf16.msra.mxu0 %v347
          %357 = vmatprep.subr.bf16.mxu0 0
          %358 = vmatpush1.bf16.msra.mxu0 %v348
          %359 = vmatprep.subr.bf16.mxu0 0
          %360 = vmatpush1.bf16.msra.mxu0 0
          %361 = vmatprep.subr.bf16.mxu0 0
          %362 = vmatpush1.bf16.msra.mxu0 0
          %363 = vmatprep.subr.bf16.mxu0 0
          %364 = vmatpush1.bf16.msra.mxu0 0
          %365 = vmatprep.subr.bf16.mxu0 0
          %366 = vmatpush1.bf16.msra.mxu0 0
          %367 = vmatprep.subr.bf16.mxu0 0
          %368 = vmatpush1.bf16.msra.mxu0 0
          %369 = vmatprep.subr.bf16.mxu0 0
          %370 = vmatpush1.bf16.msra.mxu0 0
          %371 = vmatprep.subr.bf16.mxu0 0
          %372 = vmatpush1.bf16.msra.mxu0 0
          %373 = vmatprep.subr.bf16.mxu0 0
          %374 = vmatpush1.bf16.msra.mxu0 0
          %375 = vmatprep.subr.bf16.mxu0 0
          %376 = vmatpush1.bf16.msra.mxu0 0
          %377 = vmatprep.subr.bf16.mxu0 0
          %378 = vmatpush1.bf16.msra.mxu0 0
          %379 = vmatprep.subr.bf16.mxu0 0
          %380 = vmatpush1.bf16.msra.mxu0 0
          %381 = vmatprep.subr.bf16.mxu0 0
          %382 = vmatpush1.bf16.msra.mxu0 0
          %383 = vmatprep.subr.bf16.mxu0 0
          %384 = vmatpush1.bf16.msra.mxu0 0
          %385 = vmatprep.subr.bf16.mxu0 0
          %386 = vmatpush1.bf16.msra.mxu0 0
          %387 = vmatprep.mubr.bf16.mxu0 0
          %388 = vmatmul.mubr.bf16.gmra.mrb[0].mxu0 %v353
          %v389 = vpop.f32.mrb[0].mxu0
          %v390 = vadd.f32 %v337, %v389
          %v391 = vpop.f32.mrb[0].mxu0
          %v392 = vpop.f32.mrb[0].mxu0
          %v393 = vpop.f32.mrb[0].mxu0
          %394 = vdwg.mxu0
          %v395 = vmul.f32 %v390, 0.35355338
          %v396 = vpack.c.bf16 %v395, %v395
          %vm397 = vcmask 60416
          %398 = vst.msk [vmem:[#allocation2] sm:$0xf] %vm397, %v396
          %v399 = vpack.c.bf16 %v390, %v390
          %v401 = vunpack.c.l.b16 %v399
          %v402 = vpack.c.b16 %v401, %v401
          %403 = vrot.lane.b32.xlu0 %v402, 120
          %v404 = vpop.permute.xlu0 %403
          %406 = vst.msk [vmem:[#allocation3] sm:$0xf] %vm397, %v404
          %407 = vrot.lane.b32.xlu0 %v402, 112
          %v408 = vpop.permute.xlu0 %407
          %410 = vst.msk [vmem:[#allocation4] sm:$0xf] %vm397, %v408
        $region48: #{tpu_custom_call.1} parent=31 // pred_fallthru
          _
        %s411 = smul.u32 %s35, 8
        %s412 = sshra.s32 %s411, 3
        %s413 = sand.u32 %s411, 7
        %s414 = smul.addr %s412, 4
        %s415 = scalar_lea.vmem [#allocation2], %s414
        %v416 = vld [vmem:[%s415] sm:$0xf]
        %v417 = vld [vmem:[#allocation3] sm:$0xf]
        %vm418 = vcmask 64512
        %v420 = vsel %vm418, %v416, 0
        %v423 = vsel %vm418, %v417, 0
        %425 = vmatprep.subr.bf16.mxu0 0
        %426 = vmatpush1.bf16.xpose.msra.mxu0 %v423
        %427 = vmatprep.subr.bf16.mxu0 0
        %428 = vmatpush1.bf16.xpose.msra.mxu0 0
        %429 = vmatprep.subr.bf16.mxu0 0
        %430 = vmatpush1.bf16.xpose.msra.mxu0 0
        %431 = vmatprep.subr.bf16.mxu0 0
        %432 = vmatpush1.bf16.xpose.msra.mxu0 0
        %433 = vmatprep.subr.bf16.mxu0 0
        %434 = vmatpush1.bf16.xpose.msra.mxu0 0
        %435 = vmatprep.subr.bf16.mxu0 0
        %436 = vmatpush1.bf16.xpose.msra.mxu0 0
        %437 = vmatprep.subr.bf16.mxu0 0
        %438 = vmatpush1.bf16.xpose.msra.mxu0 0
        %439 = vmatprep.subr.bf16.mxu0 0
        %440 = vmatpush1.bf16.xpose.msra.mxu0 0
        %441 = vmatprep.subr.bf16.mxu0 0
        %442 = vmatpush1.bf16.xpose.msra.mxu0 0
        %443 = vmatprep.subr.bf16.mxu0 0
        %444 = vmatpush1.bf16.xpose.msra.mxu0 0
        %445 = vmatprep.subr.bf16.mxu0 0
        %446 = vmatpush1.bf16.xpose.msra.mxu0 0
        %447 = vmatprep.subr.bf16.mxu0 0
        %448 = vmatpush1.bf16.xpose.msra.mxu0 0
        %449 = vmatprep.subr.bf16.mxu0 0
        %450 = vmatpush1.bf16.xpose.msra.mxu0 0
        %451 = vmatprep.subr.bf16.mxu0 0
        %452 = vmatpush1.bf16.xpose.msra.mxu0 0
        %453 = vmatprep.subr.bf16.mxu0 0
        %454 = vmatpush1.bf16.xpose.msra.mxu0 0
        %455 = vmatprep.subr.bf16.mxu0 0
        %456 = vmatpush1.bf16.xpose.msra.mxu0 0
        %457 = vmatprep.mubr.bf16.mxu0 0
        %458 = vmatmul.mubr.bf16.gmra.mrb[0].mxu0 %v420
        %v459 = vpop.f32.mrb[0].mxu0
        %v460 = vadd.f32 0.0, %v459
        %v461 = vpop.f32.mrb[0].mxu0
        %v462 = vpop.f32.mrb[0].mxu0
        %v463 = vpop.f32.mrb[0].mxu0
        %464 = vdwg.mxu0
        %v465 = vsel %vm418, %v460, -inf
        %466 = vmax.xlane.f32.xlu0 %v465
        %v467 = vpop.xlane.xlu0 %466
        %v468 = vsub.f32 %v460, %v467
        %v469 = vmul.f32 %v468, 1.442695
        %v470 = vpow.pop %v469
        %v471 = vsel %vm418, %v470, 0.0
        %472 = vadd.xlane.f32.xlu0 %v471
        %v473 = vpop.xlane.xlu0 %472
        %v474 = vrcp.pop %v473
        %v475 = vmul.f32 %v470, %v474
        %476 = vst.msk [vmem:[%s321] sm:$0xff] %vm418, %v475
        %v477 = vpack.c.bf16 %v475, %v475
        %v478 = vld [vmem:[#allocation4] sm:$0xf]
        %v480 = vsel %vm418, %v477, 0
        %vm482 = vcmask 1043456
        %v484 = vsel %vm482, %v478, 0
        %486 = vmatprep.subr.bf16.mxu0 0
        %487 = vmatpush1.bf16.msra.mxu0 %v484
        %488 = vmatprep.subr.bf16.mxu0 0
        %489 = vmatpush1.bf16.msra.mxu0 0
        %490 = vmatprep.subr.bf16.mxu0 0
        %491 = vmatpush1.bf16.msra.mxu0 0
        %492 = vmatprep.subr.bf16.mxu0 0
        %493 = vmatpush1.bf16.msra.mxu0 0
        %494 = vmatprep.subr.bf16.mxu0 0
        %495 = vmatpush1.bf16.msra.mxu0 0
        %496 = vmatprep.subr.bf16.mxu0 0
        %497 = vmatpush1.bf16.msra.mxu0 0
        %498 = vmatprep.subr.bf16.mxu0 0
        %499 = vmatpush1.bf16.msra.mxu0 0
        %500 = vmatprep.subr.bf16.mxu0 0
        %501 = vmatpush1.bf16.msra.mxu0 0
        %502 = vmatprep.subr.bf16.mxu0 0
        %503 = vmatpush1.bf16.msra.mxu0 0
        %504 = vmatprep.subr.bf16.mxu0 0
        %505 = vmatpush1.bf16.msra.mxu0 0
        %506 = vmatprep.subr.bf16.mxu0 0
        %507 = vmatpush1.bf16.msra.mxu0 0
        %508 = vmatprep.subr.bf16.mxu0 0
        %509 = vmatpush1.bf16.msra.mxu0 0
        %510 = vmatprep.subr.bf16.mxu0 0
        %511 = vmatpush1.bf16.msra.mxu0 0
        %512 = vmatprep.subr.bf16.mxu0 0
        %513 = vmatpush1.bf16.msra.mxu0 0
        %514 = vmatprep.subr.bf16.mxu0 0
        %515 = vmatpush1.bf16.msra.mxu0 0
        %516 = vmatprep.subr.bf16.mxu0 0
        %517 = vmatpush1.bf16.msra.mxu0 0
        %518 = vmatprep.mubr.bf16.mxu0 0
        %519 = vmatmul.mubr.bf16.gmra.mrb[0].mxu0 %v480
        %v520 = vpop.f32.mrb[0].mxu0
        %v521 = vadd.f32 0.0, %v520
        %v522 = vpop.f32.mrb[0].mxu0
        %v523 = vpop.f32.mrb[0].mxu0
        %v524 = vpop.f32.mrb[0].mxu0
        %525 = vdwg.mxu0
        %v526 = vpack.c.bf16 %v521, %v521
        %vm527 = vcmask 60416
        %528 = vst.msk [vmem:[%s314] sm:$0xf] %vm527, %v526
        %s529 = sand.u32 %s137, 1
        %s530 = scalar_lea.sflag [#allocation7], %s529
        %s531 = sand.u32 %s137, 1
        %s532 = smul.addr %s531, 4
        %s533 = scalar_lea.vmem [#allocation11], %s532
        %s534 = sand.u32 %s167, 1
        %s535 = scalar_lea.sflag [#allocation13], %s534
        %s536 = sand.u32 %s167, 1
        %s537 = smul.addr %s536, 8
        %s538 = scalar_lea.vmem [#allocation12], %s537
        // Predicated region
        $region49: #{tpu_custom_call.1} parent=31 // pred_check
          %p539 = pneg %p147
        $region50: #{tpu_custom_call.1} parent=31 // pred_check_branch
          %541 = sbr.rel (%p539) target = $region52
        $region51: #{tpu_custom_call.1} parent=31 // pred_region
          %s543 = ssub.s32 64, 64
          %544 = vsyncadd %s530, %s543
          %s545 = sadd.s32 %s35, %s34
          %s546 = smul.addr %s33, 4
          %s547 = sadd.s32 %s545, %s546
          %s548 = smul.addr %s547, 64
          %s549 = scalar_lea.hbm %s3, %s548
          %s551 = sshll.u32 %s533, 4
          %s552 = int_to_ptr.vmem [resolvable:$true] %s551
          %554 = dma.vmem_to_hbm [thread:$0]  %s552, 64, %s549, %s530
        $region52: #{tpu_custom_call.1} parent=31 // pred_fallthru
          _
        // Predicated region
        $region53: #{tpu_custom_call.1} parent=31 // pred_check
          %p555 = pneg %p177
        $region54: #{tpu_custom_call.1} parent=31 // pred_check_branch
          %557 = sbr.rel (%p555) target = $region56
        $region55: #{tpu_custom_call.1} parent=31 // pred_region
          %s559 = ssub.s32 128, 128
          %560 = vsyncadd %s535, %s559
          %s561 = sadd.s32 %s35, %s34
          %s562 = smul.addr %s33, 4
          %s563 = sadd.s32 %s561, %s562
          %s564 = smul.addr %s563, 128
          %s565 = scalar_lea.hbm %s4, %s564
          %s567 = sshll.u32 %s538, 4
          %s568 = int_to_ptr.vmem [resolvable:$true] %s567
          %570 = dma.vmem_to_hbm [thread:$0]  %s568, 128, %s565, %s535
        $region56: #{tpu_custom_call.1} parent=31 // pred_fallthru
          _
      $region32: #{tpu_custom_call.1} parent=5 // pred_fallthru
        _
      %p571 = scmp.le.s32.totalorder 2, %s23
      // Predicated region
      $region57: #{tpu_custom_call.1} parent=5 // pred_check
        %p572 = pneg %p571
      $region58: #{tpu_custom_call.1} parent=5 // pred_check_branch
        %574 = sbr.rel (%p572) target = $region60
      $region59: #{tpu_custom_call.1} parent=5 // pred_region
        %s575 = ssub.s32 %s23, 2
        // Predicated region
        $region61: #{tpu_custom_call.1} parent=59 // pred_check
          %p576 = pneg %p153
        $region62: #{tpu_custom_call.1} parent=59 // pred_check_branch
          %578 = sbr.rel (%p576) target = $region64
        $region63: #{tpu_custom_call.1} parent=59 // pred_region
          %s579 = sand.u32 %s138, 1
          %s580 = scalar_lea.sflag [#allocation7], %s579
          %s581 = sand.u32 %s138, 1
          %s582 = smul.addr %s581, 4
          %s583 = scalar_lea.vmem [#allocation11], %s582
          %584 = dma.done %s580, 64
        $region64: #{tpu_custom_call.1} parent=59 // pred_fallthru
          _
        // Predicated region
        $region65: #{tpu_custom_call.1} parent=59 // pred_check
          %p585 = pneg %p183
        $region66: #{tpu_custom_call.1} parent=59 // pred_check_branch
          %587 = sbr.rel (%p585) target = $region68
        $region67: #{tpu_custom_call.1} parent=59 // pred_region
          %s588 = sand.u32 %s168, 1
          %s589 = scalar_lea.sflag [#allocation13], %s588
          %s590 = sand.u32 %s168, 1
          %s591 = smul.addr %s590, 8
          %s592 = scalar_lea.vmem [#allocation12], %s591
          %593 = dma.done %s589, 128
        $region68: #{tpu_custom_call.1} parent=59 // pred_fallthru
          _
      $region60: #{tpu_custom_call.1} parent=5 // pred_fallthru
        _
    $region6: #{tpu_custom_call.1} parent=1 // loop_footer
      %s27 = sadd.s32 1, %s23
    $region7: #{tpu_custom_call.1} parent=1 // loop_footer_branch
      %22 = sbr.rel target = $region3
    $region8: #{tpu_custom_call.1} parent=1 // loop_exit
      _
    %594 = vsyncpa [#allocation6], 1
    %s595 = scalar_lea.sflag [#allocation6], 1
    %596 = vsyncpa %s595, 1
    %597 = vsyncpa [#allocation9], 1
    %s598 = scalar_lea.sflag [#allocation9], 1
    %599 = vsyncpa %s598, 1
    %600 = vsyncpa [#allocation7], 1
    %s601 = scalar_lea.sflag [#allocation7], 1
    %602 = vsyncpa %s601, 1
    %603 = vsyncpa [#allocation13], 1
    %s604 = scalar_lea.sflag [#allocation13], 1
    %605 = vsyncpa %s604, 1

</llo_original>
